<compile_context>
chip_gen: v5e
topology: v5e:2x2
jax: 0.10.0
libtpu: 0.0.40
codegen_flags: <defaults>
</compile_context>

<pallas_src>
import jax
import jax.numpy as jnp
from jax.experimental import pallas as pl
from jax.experimental.pallas import tpu as pltpu

_LANE = 128
_SUBLANE = 8


def trivial_mean_kernel(x_ref, w_ref, b_ref, o_ref):
    # x_ref : (TB, TK)   lane-dense flattened (N, F) features for TB set rows
    # w_ref : (TK, 128)  tile(W.T / N) zero-padded from F_out to 128 lanes
    # b_ref : (1, 128)   bias zero-padded to 128 lanes
    # o_ref : (TB, 128)  f32 output block; resident across the reduction axis,
    #                    so it is also the accumulator (P3 pattern).
    k = pl.program_id(1)

    @pl.when(k == 0)
    def _init():
        o_ref[...] = jnp.broadcast_to(b_ref[...], o_ref.shape)

    o_ref[...] += jnp.dot(x_ref[...], w_ref[...],
                          preferred_element_type=jnp.float32)


def _vmem_bytes(bb, bk):
    """Approximate VMEM footprint for one grid step (double-buffered f32)."""
    x_blk = 2 * bb * bk * 4            # input block
    w_blk = 2 * bk * _LANE * 4         # padded weight block
    o_blk = 2 * bb * _LANE * 4         # padded output/accumulator block
    b_blk = 2 * _SUBLANE * _LANE * 4   # bias row (padded)
    return x_blk + w_blk + o_blk + b_blk


def _vmem_budget_bytes():
    """(block-sizing budget, scoped vmem limit) chosen per TPU generation."""
    try:
        phys = pltpu.get_tpu_info().vmem_capacity_bytes
    except Exception:            # query unavailable -> assume the small part
        phys = 0
    if phys >= 128 * 1024 * 1024:          # v5e / v6e: plenty of headroom
        return 48 * 1024 * 1024, 64 * 1024 * 1024
    # v7x (64 MiB physical, 32 MiB scoped default) or unknown: stay conservative.
    return 24 * 1024 * 1024, 32 * 1024 * 1024


def _pick_tiles(B, K_total, budget):
    """Largest (block_b, block_k) dividing (B, K_total) that fit `budget`."""
    bb_probe = B if B < 256 else 256
    # Reduction tile: whole N*F in one block if it fits (weights DMA'd once);
    # otherwise the largest multiple-of-128 divisor that fits.
    if _vmem_bytes(bb_probe, K_total) <= budget:
        block_k = K_total
    else:
        block_k = K_total  # fallback (see TODO above)
        hi = min(K_total, 8192) // _LANE * _LANE
        for cand in range(hi, 0, -_LANE):
            if K_total % cand == 0 and _vmem_bytes(bb_probe, cand) <= budget:
                block_k = cand
                break
    # Batch tile: largest multiple-of-8 divisor of B, capped at 2048 rows.
    if B <= _SUBLANE:
        block_b = B
    else:
        block_b = B  # fallback: single batch block (always a legal block shape)
        cand = min(2048, B - B % _SUBLANE)
        while cand >= _SUBLANE:
            if B % cand == 0 and _vmem_bytes(cand, block_k) <= budget:
                block_b = cand
                break
            cand -= _SUBLANE
    return block_b, block_k


def trivial_mean_forward(x, weight, bias, *, block_b=None, block_k=None):
    """x: (B, 1, N, F) f32.  weight: (F_out, F_in).  bias: (F_out,)."""
    x_sq = jnp.squeeze(x, axis=1)                 # glue: (B, N, F)
    B, N, F = x_sq.shape
    F_out, F_in = weight.shape
    assert F_in == F, "Linear in_features must match the inner feature dim"
    assert F_out <= _LANE
    K_total = N * F_in

    # Lane-dense input: free contiguous reshape (B, N, F) -> (B, N*F).
    x2d = x_sq.reshape(B, K_total)

    # Fuse mean + Linear:  y[b, o] = sum_{n,f} x[b,n,f] * W[o,f] / N + bias[o]
    # via a single matmul against tile(W.T / N, (N, 1)), zero-padded to a
    # 128-lane-wide output.  (Constant-folds with the caller under jit; hoist
    # out of the per-call path for repeated use.)
    w_tiled = jnp.tile(weight.T.astype(jnp.float32) / jnp.float32(N), (N, 1))
    w_pad = jnp.zeros((K_total, _LANE), jnp.float32).at[:, :F_out].set(w_tiled)
    b_pad = jnp.zeros((1, _LANE), jnp.float32).at[:, :F_out].set(
        bias.astype(jnp.float32).reshape(1, F_out))

    budget, vmem_limit = _vmem_budget_bytes()
    auto_b, auto_k = _pick_tiles(B, K_total, budget)
    block_b = auto_b if block_b is None else block_b
    block_k = auto_k if block_k is None else block_k
    # Validate user-supplied / derived tiles against the (8, 128) block rules.
    assert B % block_b == 0 and (block_b % _SUBLANE == 0 or block_b == B)
    assert K_total % block_k == 0 and (block_k % _LANE == 0 or block_k == K_total)
    grid = (B // block_b, K_total // block_k)     # reduction axis last

    out_pad = pl.pallas_call(
        trivial_mean_kernel,
        out_shape=jax.ShapeDtypeStruct((B, _LANE), jnp.float32),
        grid_spec=pltpu.PrefetchScalarGridSpec(
            num_scalar_prefetch=0,
            grid=grid,
            in_specs=[
                pl.BlockSpec((block_b, block_k), lambda i, k: (i, k)),
                pl.BlockSpec((block_k, _LANE), lambda i, k: (k, 0)),
                pl.BlockSpec((1, _LANE), lambda i, k: (0, 0)),
            ],
            out_specs=pl.BlockSpec((block_b, _LANE), lambda i, k: (i, 0)),
        ),
        compiler_params=pltpu.CompilerParams(
            dimension_semantics=("parallel", "arbitrary"),
            vmem_limit_bytes=vmem_limit),
        cost_estimate=pl.CostEstimate(
            flops=2 * B * K_total * F_out,
            transcendentals=0,
            bytes_accessed=4 * (B * K_total + K_total * _LANE + B * _LANE)),
    )(x2d, w_pad, b_pad)

    return out_pad[:, :F_out]


if __name__ == "__main__":
    key = jax.random.PRNGKey(0)
    k_x, k_w, k_b = jax.random.split(key, 3)

    # Module implies inner feature dim = 2 (Linear(in_features=2, out_features=2)).
    B, N, F = 2, 8, 2
    x = jax.random.normal(k_x, (B, 1, N, F), dtype=jnp.float32)

    # Deterministic nn.Linear(2, 2) parameters (synthetic init, no checkpoint).
    bound = 1.0 / jnp.sqrt(jnp.float32(F))
    weight = jax.random.uniform(k_w, (2, 2), minval=-bound, maxval=bound,
                                dtype=jnp.float32)
    bias = jax.random.uniform(k_b, (2,), minval=-bound, maxval=bound,
                              dtype=jnp.float32)

    # Reference (same math as the PyTorch module).
    def ref_fn(xx):
        return jnp.squeeze(xx, axis=1).mean(axis=-2) @ weight.T + bias

    # 1) Demo shape, auto tiling (grid (1, 1)).
    out = jax.block_until_ready(trivial_mean_forward(x, weight, bias))
    assert out.shape == (B, 2)
    assert jnp.allclose(out, ref_fn(x), atol=1e-5, rtol=1e-5)

    # 2) Small shape exercising the tiled batch + tiled-reduction path
    #    (grid (2, 2): multi-step accumulation into the resident output block).
    B2, N2 = 16, 128
    x2 = jax.random.normal(jax.random.PRNGKey(1), (B2, 1, N2, F),
                           dtype=jnp.float32)
    out2 = jax.block_until_ready(
        trivial_mean_forward(x2, weight, bias, block_b=8, block_k=128))
    assert out2.shape == (B2, 2)
    assert jnp.allclose(out2, ref_fn(x2), atol=1e-5, rtol=1e-5)

    print("KERNEL_OK")
</pallas_src>

<mosaic_0001>
module attributes {stable_mosaic.version = 11 : i64} {
  func.func @trivial_mean_kernel(%arg0: i32, %arg1: i32, %arg2: memref<2x16xf32, #tpu.memory_space<vmem>>, %arg3: memref<16x128xf32, #tpu.memory_space<vmem>>, %arg4: memref<1x128xf32, #tpu.memory_space<vmem>>, %arg5: memref<2x128xf32, #tpu.memory_space<vmem>>) attributes {dimension_semantics = [#tpu.dimension_semantics<parallel>, #tpu.dimension_semantics<arbitrary>], iteration_bounds = array<i64: 1, 1>, scalar_prefetch = 0 : i64, scratch_operands = 0 : i64, tpu.core_type = #tpu.core_type<tc>, window_params = [{transform_indices = @transform_0, window_bounds = array<i64: 2, 16>}, {transform_indices = @transform_1, window_bounds = array<i64: 16, 128>}, {pipeline_mode = #tpu.pipeline_mode<synchronous>, transform_indices = @transform_2, window_bounds = array<i64: 1, 128>}, {transform_indices = @transform_3, window_bounds = array<i64: 2, 128>}]} {
    %c0_i32 = arith.constant 0 : i32
    %0 = arith.cmpi eq, %arg1, %c0_i32 : i32
    %1 = arith.extui %0 : i1 to i32
    %c0_i32_0 = arith.constant 0 : i32
    %2 = arith.cmpi ne, %1, %c0_i32_0 : i32
    scf.if %2 {
      %c0_8 = arith.constant 0 : index
      %c0_9 = arith.constant 0 : index
      %9 = vector.load %arg4[%c0_8, %c0_9] : memref<1x128xf32, #tpu.memory_space<vmem>>, vector<1x128xf32>
      %10 = vector.shape_cast %9 : vector<1x128xf32> to vector<1x128xf32>
      %11 = vector.broadcast %10 : vector<1x128xf32> to vector<2x128xf32>
      %c0_10 = arith.constant 0 : index
      %c0_11 = arith.constant 0 : index
      %12 = vector.load %arg5[%c0_10, %c0_11] : memref<2x128xf32, #tpu.memory_space<vmem>>, vector<2x128xf32>
      tpu.vector_store %arg5[%c0_10, %c0_11], %11 {strides = array<i32>} : memref<2x128xf32, #tpu.memory_space<vmem>>, vector<2x128xf32>,
    } else {
    }
    %c0 = arith.constant 0 : index
    %c0_1 = arith.constant 0 : index
    %3 = vector.load %arg5[%c0, %c0_1] : memref<2x128xf32, #tpu.memory_space<vmem>>, vector<2x128xf32>
    %c0_2 = arith.constant 0 : index
    %c0_3 = arith.constant 0 : index
    %4 = vector.load %arg2[%c0_2, %c0_3] : memref<2x16xf32, #tpu.memory_space<vmem>>, vector<2x16xf32>
    %c0_4 = arith.constant 0 : index
    %c0_5 = arith.constant 0 : index
    %5 = vector.load %arg3[%c0_4, %c0_5] : memref<16x128xf32, #tpu.memory_space<vmem>>, vector<16x128xf32>
    %cst = arith.constant dense<0.000000e+00> : vector<2x128xf32>
    %6 = tpu.matmul %4, %5, %cst {dimension_numbers = #tpu.dot_dimension_numbers<[1], [0], [0], [1], [0, 0, 1, 1], [], []>} : vector<2x16xf32>, vector<16x128xf32>, vector<2x128xf32> -> vector<2x128xf32>
    %7 = arith.addf %3, %6 : vector<2x128xf32>
    %c0_6 = arith.constant 0 : index
    %c0_7 = arith.constant 0 : index
    %8 = vector.load %arg5[%c0_6, %c0_7] : memref<2x128xf32, #tpu.memory_space<vmem>>, vector<2x128xf32>
    tpu.vector_store %arg5[%c0_6, %c0_7], %7 {strides = array<i32>} : memref<2x128xf32, #tpu.memory_space<vmem>>, vector<2x128xf32>,
    return
  }
  func.func @transform_0(%arg0: i32, %arg1: i32) -> (i32, i32) {
    %c0_i32 = arith.constant 0 : i32
    return %arg0, %arg1 : i32, i32
  }
  func.func @transform_1(%arg0: i32, %arg1: i32) -> (i32, i32) {
    %c0_i32 = arith.constant 0 : i32
    %c0_i32_0 = arith.constant 0 : i32
    return %arg1, %c0_i32 : i32, i32
  }
  func.func @transform_2(%arg0: i32, %arg1: i32) -> (i32, i32) {
    %c0_i32 = arith.constant 0 : i32
    %c0_i32_0 = arith.constant 0 : i32
    %c0_i32_1 = arith.constant 0 : i32
    return %c0_i32, %c0_i32_0 : i32, i32
  }
  func.func @transform_3(%arg0: i32, %arg1: i32) -> (i32, i32) {
    %c0_i32 = arith.constant 0 : i32
    %c0_i32_0 = arith.constant 0 : i32
    return %arg0, %c0_i32 : i32, i32
  }
}

</mosaic_0001>

<llo_original>
// kernel: tpu_custom_call.1
$region0: #{tpu_custom_call.1}
  #allocation0 [shape = 'u32[]', space=smem, size = 0x4, offset = 0x4, fixed_abs, tag = 'smem constant byte address 0x4 - core index']
  #allocation1 [shape = 'u32[72,128]{1,0:T(1,128)}', space=vmem, size = 0x9000, scoped, tag = 'internal scratch']
  %s0 = inlined_call_operand.hbm [shape: f32[2,16], index: 0, kind: input, shape index: {}]
  %s1 = inlined_call_operand.hbm [shape: f32[16,128], index: 1, kind: input, shape index: {}]
  %s2 = inlined_call_operand.vmem [shape: f32[1,128], index: 2, kind: input, shape index: {}]
  %s3 = inlined_call_operand.hbm [shape: f32[2,128], index: 3, kind: output, shape index: {}]
  %s4 = sld [smem:[#allocation0]]
  $region34: #{tpu_custom_call.1} parent=0
    _
  %s6 = ssub.s32 1, %s4
  %s7 = scalar_select 0, %s6, %s4
  $region1: #{tpu_custom_call.1} parent=0
    #allocation2 [shape = 'u8[1024]{0}', space=vmem, size = 0x400, scoped, tag = 'input window, operand 0, single buffered']
    #allocation3 [shape = 's32[1]{0}', space=sflag, size = 0x4, scoped, tag = 'scoped memory for tpu_custom_call.1']
    #allocation4 [shape = 's32[1]{0}', space=sflag, size = 0x4, scoped, tag = 'scoped memory for tpu_custom_call.1']
    #allocation5 [shape = 'u8[8192]{0}', space=vmem, size = 0x2000, scoped, tag = 'input window, operand 1, single buffered']
    #allocation6 [shape = 's32[1]{0}', space=sflag, size = 0x4, scoped, tag = 'scoped memory for tpu_custom_call.1']
    #allocation7 [shape = 'u8[1024]{0}', space=vmem, size = 0x400, scoped, tag = 'output window, operand 0, single buffered']
    %8 = vsyncpa [#allocation3], 0
    %9 = vsyncpa [#allocation6], 0
    %10 = vsyncpa [#allocation4], 0
    // Predicated region
    $region2: #{tpu_custom_call.1} parent=1 // pred_check
      _
    $region3: #{tpu_custom_call.1} parent=1 // pred_check_branch
      %12 = sbr.rel (0) target = $region5
    $region4: #{tpu_custom_call.1} parent=1 // pred_region
      %14 = vsyncadd [#allocation3], 0
      %s16 = sshll.u32 %s0, 4
      %s17 = int_to_ptr.hbm [resolvable:$true] %s16
      %s18 = sshll.u32 [#allocation2], 4
      %s19 = int_to_ptr.vmem [resolvable:$true] %s18
      %21 = dma.hbm_to_vmem [thread:$0]  %s17, 32, %s19, [#allocation3]
    $region5: #{tpu_custom_call.1} parent=1 // pred_fallthru
      _
    // Predicated region
    $region6: #{tpu_custom_call.1} parent=1 // pred_check
      _
    $region7: #{tpu_custom_call.1} parent=1 // pred_check_branch
      %23 = sbr.rel (0) target = $region9
    $region8: #{tpu_custom_call.1} parent=1 // pred_region
      %25 = vsyncadd [#allocation6], 0
      %s26 = sshll.u32 %s1, 4
      %s27 = int_to_ptr.hbm [resolvable:$true] %s26
      %s28 = sshll.u32 [#allocation5], 4
      %s29 = int_to_ptr.vmem [resolvable:$true] %s28
      %34 = dma.hbm_to_vmem [thread:$0]  %s27, 256, %s29, [#allocation6], 128, 128, 8
    $region9: #{tpu_custom_call.1} parent=1 // pred_fallthru
      _
    // Predicated region
    $region10: #{tpu_custom_call.1} parent=1 // pred_check
      _
    $region11: #{tpu_custom_call.1} parent=1 // pred_check_branch
      %36 = sbr.rel (0) target = $region13
    $region12: #{tpu_custom_call.1} parent=1 // pred_region
      _
    $region13: #{tpu_custom_call.1} parent=1 // pred_fallthru
      _
    // Predicated region
    $region14: #{tpu_custom_call.1} parent=1 // pred_check
      _
    $region15: #{tpu_custom_call.1} parent=1 // pred_check_branch
      %38 = sbr.rel (0) target = $region17
    $region16: #{tpu_custom_call.1} parent=1 // pred_region
      %40 = dma.done [#allocation3], 32
    $region17: #{tpu_custom_call.1} parent=1 // pred_fallthru
      _
    // Predicated region
    $region18: #{tpu_custom_call.1} parent=1 // pred_check
      _
    $region19: #{tpu_custom_call.1} parent=1 // pred_check_branch
      %42 = sbr.rel (0) target = $region21
    $region20: #{tpu_custom_call.1} parent=1 // pred_region
      %44 = dma.done [#allocation6], 256
    $region21: #{tpu_custom_call.1} parent=1 // pred_fallthru
      _
    %p45 = scmp.eq.s32.totalorder 0, 0
    // Predicated region
    $region22: #{tpu_custom_call.1} parent=1 // pred_check
      %p46 = pneg %p45
    $region23: #{tpu_custom_call.1} parent=1 // pred_check_branch
      %48 = sbr.rel (%p46) target = $region25
    $region24: #{tpu_custom_call.1} parent=1 // pred_region
      %v49 = vld [vmem:[%s2] sm:$0x1]
      %v51 = vperm.slane %v49, 0
      %53 = vst [vmem:[#allocation7] sm:$0x3] %v51
    $region25: #{tpu_custom_call.1} parent=1 // pred_fallthru
      _
    %v54 = vld [vmem:[#allocation7] sm:$0x3]
    %v55 = vld [vmem:[#allocation2] sm:$0x3]
    %v56 = vld [vmem:[#allocation5] sm:$0xff]
    %v57 = vld [vmem:[#allocation5 + $0x8] sm:$0xff]
    %vm58 = vcmask 130048
    %v60 = vsel %vm58, %v55, 0
    %62 = vmatpush.msra.mxu0 0.0
    %63 = vmatpush.msra.mxu0 0.0
    %64 = vmatpush.msra.mxu0 0.0
    %65 = vmatpush.msra.mxu0 0.0
    %66 = vmatpush.msra.mxu0 0.0
    %67 = vmatpush.msra.mxu0 0.0
    %68 = vmatpush.msra.mxu0 0.0
    %69 = vmatpush.msra.mxu0 0.0
    %70 = vmatpush.msra.mxu0 0.0
    %71 = vmatpush.msra.mxu0 0.0
    %72 = vmatpush.msra.mxu0 0.0
    %73 = vmatpush.msra.mxu0 0.0
    %74 = vmatpush.msra.mxu0 0.0
    %75 = vmatpush.msra.mxu0 0.0
    %76 = vmatpush.msra.mxu0 %v57
    %77 = vmatpush.msra.mxu0 %v56
    %78 = vmatmul.f32.gmra.mxu0 %v60
    %v79 = vpop.f32.mrf.mxu0
    %v80 = vadd.f32 0.0, %v79
    %81 = vdwg.mxu0
    %v82 = vadd.f32 %v54, %v80
    %83 = vst [vmem:[#allocation7] sm:$0x3] %v82
    // Predicated region
    $region26: #{tpu_custom_call.1} parent=1 // pred_check
      _
    $region27: #{tpu_custom_call.1} parent=1 // pred_check_branch
      %85 = sbr.rel (0) target = $region29
    $region28: #{tpu_custom_call.1} parent=1 // pred_region
      %87 = vsyncadd [#allocation4], 0
      %s89 = sshll.u32 [#allocation7], 4
      %s90 = int_to_ptr.vmem [resolvable:$true] %s89
      %s91 = sshll.u32 %s3, 4
      %s92 = int_to_ptr.hbm [resolvable:$true] %s91
      %94 = dma.vmem_to_hbm [thread:$0]  %s90, 32, %s92, [#allocation4]
    $region29: #{tpu_custom_call.1} parent=1 // pred_fallthru
      _
    // Predicated region
    $region30: #{tpu_custom_call.1} parent=1 // pred_check
      _
    $region31: #{tpu_custom_call.1} parent=1 // pred_check_branch
      %96 = sbr.rel (0) target = $region33
    $region32: #{tpu_custom_call.1} parent=1 // pred_region
      %98 = dma.done [#allocation4], 32
    $region33: #{tpu_custom_call.1} parent=1 // pred_fallthru
      _
    %99 = vsyncpa [#allocation3], 1
    %100 = vsyncpa [#allocation6], 1
    %101 = vsyncpa [#allocation4], 1

</llo_original>
